<compile_context>
chip_gen: v7x
topology: tpu7x:2x2x1
jax: 0.10.0
libtpu: 0.0.40
codegen_flags: <defaults>
</compile_context>

<pallas_src>
import functools

import jax
import jax.numpy as jnp
from jax import lax
from jax.experimental import pallas as pl
from jax.experimental.pallas import tpu as pltpu


# ----------------------------------------------------------------------------
# pltpu.roll direction probe (one tiny kernel, cached for the process).
# ----------------------------------------------------------------------------
@functools.lru_cache(maxsize=None)
def _roll_shift_sign() -> int:
    """+1 if pltpu.roll matches jnp.roll's shift direction, else -1.

    The tap schedule depends on the rotation direction; probing once at
    runtime keeps the kernel correct across Mosaic versions.
    """
    def probe(x_ref, o_ref):
        o_ref[...] = pltpu.roll(x_ref[...], 1, axis=0)

    x = lax.broadcasted_iota(jnp.float32, (8, 128), 0)
    out = pl.pallas_call(
        probe, out_shape=jax.ShapeDtypeStruct((8, 128), jnp.float32))(x)
    return 1 if bool(jnp.all(out == jnp.roll(x, 1, axis=0))) else -1


# ----------------------------------------------------------------------------
# Pallas kernel: one (image, row-tile) per grid step.
# ----------------------------------------------------------------------------
def _aspp_kernel(roll_sign,
                 bias_ref,   # (1, 1, C)  f32: global-pool branch + all folded biases
                 w1f_ref,    # (C, C)        folded 1x1-branch weight
                 w6f_ref,    # (3, 3, C, C)  folded dilation-6 weights
                 w12f_ref,   # (3, 3, C, C)  folded dilation-12 weights
                 xp_ref,     # (N, H+24, Wc+32, C) zero-padded image, left in HBM
                 o_ref,      # (1, TH, Wc, C) output row tile
                 band_ref):  # (TH+24, Wc+32, C) VMEM scratch (halo'd row band)
    _, TH, Wc, C = o_ref.shape
    band_rows, Wp, _ = band_ref.shape          # TH + 24, Wc + 32
    flat = band_rows * Wp

    n = pl.program_id(0)
    t = pl.program_id(1)

    # Halo'd row band for this tile: padded rows [t*TH, t*TH + TH + 24).
    # Manual DMA because Blocked BlockSpecs cannot express overlapping windows.
    # TODO(synk): double-buffer this band DMA (2-deep scratch + DMA semaphores)
    # to overlap the fetch with the 19 matmuls below.
    pltpu.sync_copy(xp_ref.at[n, pl.ds(t * TH, band_rows)], band_ref)

    # One f32 accumulator for the fused output of all four ASPP branches,
    # seeded with the per-image (global-pool + biases) row vector.
    acc = jnp.broadcast_to(bias_ref[0].astype(jnp.float32), (TH * Wc, C))

    def tap(src, oy, w):
        # Row slice on the leading axis is free; the fixed [16:16+Wc] column
        # window is 8-sublane aligned -> unmasked loads, free reshape.
        patch = src[oy:oy + TH, 16:16 + Wc, :].reshape(TH * Wc, C)
        return jnp.dot(patch, w, preferred_element_type=jnp.float32)

    # ---- column shift 0: 1x1 branch + centre columns of both 3x3 branches ---
    acc = acc + tap(band_ref, 12, w1f_ref[...])
    for d, w_ref in ((6, w6f_ref), (12, w12f_ref)):
        for ky in range(3):
            acc = acc + tap(band_ref, 12 + (ky - 1) * d, w_ref[ky, 1])

    # ---- column shifts +-6 / +-12: one XLU roll per distinct offset ---------
    # The band is flattened to (rows*Wp, C) so the roll is a plain 2-D sublane
    # rotation; |shift| <= 12 < the 16-column pad, so the central window never
    # reads across a row boundary or the cyclic wrap.
    for d, w_ref in ((6, w6f_ref), (12, w12f_ref)):
        for kx in (0, 2):
            s = (kx - 1) * d                          # column tap offset
            rolled = pltpu.roll(
                band_ref[...].reshape(flat, C),
                (-roll_sign * s) % flat,
                axis=0,
            ).reshape(band_rows, Wp, C)
            for ky in range(3):
                acc = acc + tap(rolled, 12 + (ky - 1) * d, w_ref[ky, kx])

    o_ref[0] = acc.reshape(TH, Wc, C).astype(o_ref.dtype)


def _pick_row_tile(H):
    if H <= 64:
        return H
    for th in range(64, 0, -1):
        if H % th == 0:
            return th
    return H


# ----------------------------------------------------------------------------
# Wrapper: NCHW in, NCHW out (matches the PyTorch module).
# ----------------------------------------------------------------------------
def aspp_forward(x_nchw, params, *, row_tile=None, compute_dtype=jnp.float32):
    N, C, H, W = x_nchw.shape
    f32 = jnp.float32
    hp = dict(precision="highest")            # exact f32 weight folding

    if row_tile is None:
        row_tile = _pick_row_tile(H)
    assert H % row_tile == 0, "row_tile must divide H"
    TH = row_tile
    Wc = (W + 7) // 8 * 8                     # sublane-friendly compute width

    # ---- fold conv_1x1_output into each branch (single in-kernel accumulator)
    wo = params['out_w'][:, :, 0, 0].astype(f32).T.reshape(4, C, C)  # [img,a1,a6,a12]
    wm = params['conv_w'][:, :, 0, 0].astype(f32).T                  # (Cin, Cout)
    w1 = params['a1_w'][:, :, 0, 0].astype(f32).T
    w6 = jnp.transpose(params['a6_w'], (2, 3, 1, 0)).astype(f32)     # (kh,kw,Cin,Cout)
    w12 = jnp.transpose(params['a12_w'], (2, 3, 1, 0)).astype(f32)

    wmf = jnp.dot(wm, wo[0], **hp)
    w1f = jnp.dot(w1, wo[1], **hp)
    w6f = jnp.einsum('hwio,od->hwid', w6, wo[2], **hp)
    w12f = jnp.einsum('hwio,od->hwid', w12, wo[3], **hp)
    b_all = (jnp.dot(params['conv_b'].astype(f32), wo[0], **hp)
             + jnp.dot(params['a1_b'].astype(f32), wo[1], **hp)
             + jnp.dot(params['a6_b'].astype(f32), wo[2], **hp)
             + jnp.dot(params['a12_b'].astype(f32), wo[3], **hp)
             + params['out_b'].astype(f32))                          # (C,)

    # ---- global-pool branch == per-image constant row (upsample of 1x1 map) -
    m = jnp.mean(x_nchw.astype(f32), axis=(2, 3))                    # (N, C)
    row_bias = (jnp.dot(m, wmf, **hp) + b_all[None, :]).reshape(N, 1, C)

    # ---- NHWC activations, zero-padded 12 rows / 16(+align) columns ---------
    # (16-column pad keeps every in-kernel tap window 8-sublane aligned.)
    x = jnp.transpose(x_nchw, (0, 2, 3, 1)).astype(compute_dtype)
    xp = jnp.pad(x, ((0, 0), (12, 12), (16, 16 + (Wc - W)), (0, 0)))

    kernel = functools.partial(_aspp_kernel, _roll_shift_sign())
    # TODO(synk): for production channel counts pad C to a multiple of 128 in
    # the wrapper (and for tiny C repack W*C onto the lane axis) so the output
    # store is lane-dense instead of masked.

    def call(single_buffer_weights):
        if single_buffer_weights:
            # Constant-index weights: one resident VMEM buffer, no double-buffer.
            wspec = lambda s: pl.BlockSpec(s, lambda n, t: (0,) * len(s),
                                           pipeline_mode=pl.Buffered(1))
        else:
            wspec = lambda s: pl.BlockSpec(s, lambda n, t: (0,) * len(s))
        return pl.pallas_call(
            kernel,
            out_shape=jax.ShapeDtypeStruct((N, H, Wc, C), x_nchw.dtype),
            grid=(N, H // TH),
            in_specs=[
                pl.BlockSpec((1, 1, C), lambda n, t: (n, 0, 0)),     # row_bias
                wspec((C, C)),                                       # w1f
                wspec((3, 3, C, C)),                                 # w6f
                wspec((3, 3, C, C)),                                 # w12f
                pl.BlockSpec(memory_space=pl.ANY),                   # xp (HBM)
            ],
            out_specs=pl.BlockSpec((1, TH, Wc, C), lambda n, t: (n, t, 0, 0)),
            scratch_shapes=[pltpu.VMEM((TH + 24, Wc + 32, C), compute_dtype)],
            compiler_params=pltpu.CompilerParams(
                dimension_semantics=("parallel", "parallel"),
                vmem_limit_bytes=64 * 1024 * 1024),
        )(row_bias,
          w1f.astype(compute_dtype), w6f.astype(compute_dtype),
          w12f.astype(compute_dtype), xp)

    try:
        out_nhwc = call(True)        # single-buffered resident weights
    except Exception:                # pipeline_mode / Buffered(1) unsupported
        out_nhwc = call(False)

    return jnp.transpose(out_nhwc[:, :, :W, :], (0, 3, 1, 2))       # back to NCHW


# ----------------------------------------------------------------------------
# Deterministic parameter init (PyTorch OIHW weight layout).
# ----------------------------------------------------------------------------
def init_params(key, C):
    ks = jax.random.split(key, 10)
    w = lambda k, s: (jax.random.normal(k, s, jnp.float32) * 0.1)
    return dict(
        conv_w=w(ks[0], (C, C, 1, 1)),   conv_b=w(ks[1], (C,)),
        a1_w=w(ks[2], (C, C, 1, 1)),     a1_b=w(ks[3], (C,)),
        a6_w=w(ks[4], (C, C, 3, 3)),     a6_b=w(ks[5], (C,)),
        a12_w=w(ks[6], (C, C, 3, 3)),    a12_b=w(ks[7], (C,)),
        out_w=w(ks[8], (C, 4 * C, 1, 1)), out_b=w(ks[9], (C,)),
    )


# ----------------------------------------------------------------------------
# Pure-JAX reference (mirrors the PyTorch forward) for the correctness check.
# ----------------------------------------------------------------------------
def aspp_reference(x, p):
    def conv(x, w, b, pad=0, dil=1):
        y = lax.conv_general_dilated(
            x, w, window_strides=(1, 1),
            padding=[(pad, pad), (pad, pad)],
            rhs_dilation=(dil, dil),
            dimension_numbers=('NCHW', 'OIHW', 'NCHW'))
        return y + b[None, :, None, None]

    N, C, H, W = x.shape
    img = jnp.mean(x, axis=(2, 3), keepdims=True)
    img = conv(img, p['conv_w'], p['conv_b'])
    img = jnp.broadcast_to(img, (N, C, H, W))          # bilinear upsample of 1x1
    a1 = conv(x, p['a1_w'], p['a1_b'])
    a6 = conv(x, p['a6_w'], p['a6_b'], pad=6, dil=6)
    a12 = conv(x, p['a12_w'], p['a12_b'], pad=12, dil=12)
    cat = jnp.concatenate([img, a1, a6, a12], axis=1)
    return conv(cat, p['out_w'], p['out_b'])


if __name__ == "__main__":
    key = jax.random.PRNGKey(0)
    k_x, k_p = jax.random.split(key)

    N, C, H, W = 2, 4, 16, 16
    x = jax.random.normal(k_x, (N, C, H, W), jnp.float32)
    params = init_params(k_p, C)

    ref = aspp_reference(x, params)

    # f32 datapath, two row tiles per image (exercises the halo'd row tiling).
    out = jax.block_until_ready(aspp_forward(x, params, row_tile=8))
    assert out.shape == (N, C, H, W)
    err = float(jnp.max(jnp.abs(out - ref)))
    assert err < 3e-4, f"f32 max abs err {err}"

    # bf16 datapath (MXU-native), single row tile per image.
    out_bf16 = jax.block_until_ready(
        aspp_forward(x, params, row_tile=16, compute_dtype=jnp.bfloat16))
    err_bf16 = float(jnp.max(jnp.abs(out_bf16 - ref)))
    assert err_bf16 < 3e-2, f"bf16 max abs err {err_bf16}"

    print("KERNEL_OK")
</pallas_src>

<mosaic_0001>
module attributes {stable_mosaic.version = 11 : i64} {
  func.func @probe(%arg0: memref<8x128xf32, #tpu.memory_space<vmem>>, %arg1: memref<8x128xf32, #tpu.memory_space<vmem>>) attributes {dimension_semantics = [], scalar_prefetch = 0 : i64, scratch_operands = 0 : i64, tpu.core_type = #tpu.core_type<tc>} {
    %c0 = arith.constant 0 : index
    %c0_0 = arith.constant 0 : index
    %0 = vector.load %arg0[%c0, %c0_0] : memref<8x128xf32, #tpu.memory_space<vmem>>, vector<8x128xf32>
    %c1_i32 = arith.constant 1 : i32
    %1 = tpu.dynamic_rotate %0 by %c1_i32 dim 0 : vector<8x128xf32>, i32 -> vector<8x128xf32>
    %c0_1 = arith.constant 0 : index
    %c0_2 = arith.constant 0 : index
    %2 = vector.load %arg1[%c0_1, %c0_2] : memref<8x128xf32, #tpu.memory_space<vmem>>, vector<8x128xf32>
    tpu.vector_store %arg1[%c0_1, %c0_2], %1 {strides = array<i32>} : memref<8x128xf32, #tpu.memory_space<vmem>>, vector<8x128xf32>,
    return
  }
}

</mosaic_0001>

<llo_original>
// kernel: tpu_custom_call.1
$region0: #{tpu_custom_call.1}
  #allocation0 [shape = 'u32[]', space=smem, size = 0x4, offset = 0x4, fixed_abs, tag = 'smem constant byte address 0x4 - core index']
  #allocation1 [shape = 'u32[144,128]{1,0:T(1,128)}', space=vmem, size = 0x12000, scoped, tag = 'internal scratch']
  %s0 = inlined_call_operand.hbm [shape: f32[8,128], index: 0, kind: input, shape index: {}]
  %s1 = inlined_call_operand.hbm [shape: f32[8,128], index: 1, kind: output, shape index: {}]
  %s2 = sld [smem:[#allocation0]]
  $region18: #{tpu_custom_call.1} parent=0
    _
  %s4 = ssub.s32 1, %s2
  %s5 = scalar_select 0, %s4, %s2
  $region1: #{tpu_custom_call.1} parent=0
    #allocation2 [shape = 'u8[4096]{0}', space=vmem, size = 0x1000, scoped, tag = 'input window, operand 0, single buffered']
    #allocation3 [shape = 's32[1]{0}', space=sflag, size = 0x4, scoped, tag = 'scoped memory for tpu_custom_call.1']
    #allocation4 [shape = 's32[1]{0}', space=sflag, size = 0x4, scoped, tag = 'scoped memory for tpu_custom_call.1']
    #allocation5 [shape = 'u8[4096]{0}', space=vmem, size = 0x1000, scoped, tag = 'output window, operand 0, single buffered']
    %6 = vsyncpa [#allocation3], 0
    %7 = vsyncpa [#allocation4], 0
    // Predicated region
    $region2: #{tpu_custom_call.1} parent=1 // pred_check
      _
    $region3: #{tpu_custom_call.1} parent=1 // pred_check_branch
      %9 = sbr.rel (0) target = $region5
    $region4: #{tpu_custom_call.1} parent=1 // pred_region
      %s11 = ssub.s32 128, 128
      %12 = vsyncadd [#allocation3], %s11
      %s14 = sshll.u32 [#allocation2], 4
      %s15 = int_to_ptr.vmem [resolvable:$true] %s14
      %17 = dma.hbm_to_vmem [thread:$0]  %s0, 128, %s15, [#allocation3]
    $region5: #{tpu_custom_call.1} parent=1 // pred_fallthru
      _
    // Predicated region
    $region6: #{tpu_custom_call.1} parent=1 // pred_check
      _
    $region7: #{tpu_custom_call.1} parent=1 // pred_check_branch
      %19 = sbr.rel (0) target = $region9
    $region8: #{tpu_custom_call.1} parent=1 // pred_region
      %20 = dma.done [#allocation3], 128
    $region9: #{tpu_custom_call.1} parent=1 // pred_fallthru
      _
    %v21 = vld [vmem:[#allocation2] sm:$0xff]
    %v22 = vrot.slane %v21, 7
    %23 = vst [vmem:[#allocation5] sm:$0xff] %v22
    // Predicated region
    $region10: #{tpu_custom_call.1} parent=1 // pred_check
      _
    $region11: #{tpu_custom_call.1} parent=1 // pred_check_branch
      %25 = sbr.rel (0) target = $region13
    $region12: #{tpu_custom_call.1} parent=1 // pred_region
      %s27 = ssub.s32 128, 128
      %28 = vsyncadd [#allocation4], %s27
      %s30 = sshll.u32 [#allocation5], 4
      %s31 = int_to_ptr.vmem [resolvable:$true] %s30
      %33 = dma.vmem_to_hbm [thread:$0]  %s31, 128, %s1, [#allocation4]
    $region13: #{tpu_custom_call.1} parent=1 // pred_fallthru
      _
    // Predicated region
    $region14: #{tpu_custom_call.1} parent=1 // pred_check
      _
    $region15: #{tpu_custom_call.1} parent=1 // pred_check_branch
      %35 = sbr.rel (0) target = $region17
    $region16: #{tpu_custom_call.1} parent=1 // pred_region
      %36 = dma.done [#allocation4], 128
    $region17: #{tpu_custom_call.1} parent=1 // pred_fallthru
      _
    %37 = vsyncpa [#allocation3], 1
    %38 = vsyncpa [#allocation4], 1

</llo_original>
